<compile_context>
chip_gen: v5e
topology: v5e:2x2
jax: 0.10.0
libtpu: 0.0.40
codegen_flags: <defaults>
</compile_context>

<pallas_src>
import jax
import jax.numpy as jnp
from jax.experimental import pallas as pl
from jax.experimental.pallas import tpu as pltpu


def _hsigmoid_kernel(x_ref, o_ref):
    # relu6(x + 3) / 6  ==  clamp(x + 3, 0, 6) / 6   (pure VPU; memory-bound)
    x = x_ref[...].astype(jnp.float32)
    y = jnp.minimum(jnp.maximum(x + 3.0, 0.0), 6.0) * (1.0 / 6.0)
    o_ref[...] = y.astype(o_ref.dtype)


_LANE_CANDIDATES = (4096, 2048, 1024, 512, 256, 128)


def _hsigmoid_jnp(x):
    """Plain-JAX fallback for tiny / unaligned tails (< 128 elements)."""
    y = jnp.minimum(jnp.maximum(x.astype(jnp.float32) + 3.0, 0.0), 6.0) * (1.0 / 6.0)
    return y.astype(x.dtype)


def _choose_tile_rows(rows, lanes, itemsize, sublane, target_block_bytes):
    """Pick tile_rows: sublane-aligned, <= target_block_bytes, >=2 grid steps
    for >=2 MiB arrays (v7x megacore), and an even divisor of rows if cheap."""
    row_bytes = lanes * itemsize
    max_tile_rows = max(sublane, (target_block_bytes // row_bytes) // sublane * sublane)
    total_bytes = rows * row_bytes
    # v7x has 2 TensorCores; demand >= 2 grid steps for anything >= ~2 MiB so
    # both get a shard. No effect on v5e/v6e (single TC).
    min_steps = 2 if (total_bytes >= (2 << 20) and rows >= 2 * sublane) else 1

    if rows <= max_tile_rows and min_steps == 1:
        return rows  # single block == full array dims (no (8,128) constraint)

    steps = max(min_steps, pl.cdiv(rows, max_tile_rows))
    tile = pl.cdiv(rows, steps)
    tile = ((tile + sublane - 1) // sublane) * sublane
    tile = max(sublane, min(tile, max_tile_rows))

    # Prefer an even split (no masked partial last block): largest multiple of
    # sublane <= tile that divides rows, as long as it doesn't blow up the grid.
    if rows % tile != 0 and rows % sublane == 0:
        t = tile
        while t > sublane and rows % t != 0:
            t -= sublane
        if rows % t == 0 and pl.cdiv(rows, t) <= 2 * steps:
            tile = t
    return tile


def _hsigmoid_2d(x2d, *, sublane, target_block_bytes):
    rows, lanes = x2d.shape
    dtype = x2d.dtype
    itemsize = jnp.dtype(dtype).itemsize
    tile_rows = _choose_tile_rows(rows, lanes, itemsize, sublane, target_block_bytes)

    grid = (pl.cdiv(rows, tile_rows),)
    block = (tile_rows, lanes)
    n = rows * lanes
    block_bytes = tile_rows * lanes * itemsize
    # 2 input buffers + 2 output buffers (default double buffering) + headroom.
    # Computed from the block so it scales with target_block_bytes and never
    # exceeds ~40 MiB at the 8 MiB default (safe against v7x's 64 MiB VMEM).
    vmem_limit = max(16 << 20, 4 * block_bytes + (8 << 20))

    cost = pl.CostEstimate(
        flops=4 * n,
        transcendentals=0,
        bytes_accessed=2 * n * itemsize,
    )

    return pl.pallas_call(
        _hsigmoid_kernel,
        out_shape=jax.ShapeDtypeStruct((rows, lanes), dtype),
        grid_spec=pltpu.PrefetchScalarGridSpec(
            num_scalar_prefetch=0,
            grid=grid,
            in_specs=[pl.BlockSpec(block, lambda i: (i, 0))],
            out_specs=pl.BlockSpec(block, lambda i: (i, 0)),
        ),
        compiler_params=pltpu.CompilerParams(
            dimension_semantics=("parallel",),
            vmem_limit_bytes=vmem_limit,
        ),
        cost_estimate=cost,
    )(x2d)


def hsigmoid(x: jax.Array, *, target_block_bytes: int = 8 << 20) -> jax.Array:
    """Elementwise hard-sigmoid matching torch.nn.functional.relu6(x + 3) / 6."""
    orig_shape = x.shape
    dtype = x.dtype
    n = x.size
    if n == 0:
        return x
    itemsize = jnp.dtype(dtype).itemsize
    # Sublane packing of the second-to-last block dim: f32 -> 8, bf16 -> 16, int8 -> 32.
    sublane = max(8, 32 // itemsize)

    flat = x.reshape(-1)

    # Widest lane width that divides n AND keeps rows >= sublane (full vregs,
    # unmasked stores); otherwise the narrowest divisor (tiny arrays).
    lanes = None
    for w in _LANE_CANDIDATES:
        if n % w == 0 and (n // w) >= sublane:
            lanes = w
            break
    if lanes is None:
        for w in reversed(_LANE_CANDIDATES):
            if n % w == 0:
                lanes = w
                break

    if lanes is None:
        # Not divisible by 128: run the kernel on the 128-aligned prefix and
        # compute only the <128-element tail with plain jnp (no whole-array
        # pad/slice passes over HBM).
        n_main = (n // 128) * 128
        if n_main == 0:
            return _hsigmoid_jnp(flat).reshape(orig_shape)
        main = hsigmoid(flat[:n_main], target_block_bytes=target_block_bytes)
        tail = _hsigmoid_jnp(flat[n_main:])
        return jnp.concatenate([main, tail]).reshape(orig_shape)

    rows = n // lanes
    out2d = _hsigmoid_2d(
        flat.reshape(rows, lanes), sublane=sublane, target_block_bytes=target_block_bytes
    )
    return out2d.reshape(orig_shape)


def _ref_hsigmoid(x):
    y = jnp.clip(x.astype(jnp.float32) + 3.0, 0.0, 6.0) / 6.0
    return y.astype(x.dtype)


if __name__ == "__main__":
    key = jax.random.PRNGKey(0)
    k1, k2, k3, k4, k5 = jax.random.split(key, 5)

    # 1) Primary spec-sized test: small NCHW activation (single full block).
    x = jax.random.normal(k1, (2, 4, 16, 16), dtype=jnp.float32) * 4.0
    out = hsigmoid(x)
    jax.block_until_ready(out)
    assert out.shape == x.shape and out.dtype == x.dtype
    assert jnp.max(jnp.abs(out - _ref_hsigmoid(x))) < 1e-6

    # 2) Odd element count -> aligned-prefix kernel + jnp tail path.
    x_odd = jax.random.normal(k2, (3, 5, 7, 9), dtype=jnp.float32) * 4.0
    out_odd = hsigmoid(x_odd)
    jax.block_until_ready(out_odd)
    assert out_odd.shape == x_odd.shape and out_odd.dtype == x_odd.dtype
    assert jnp.max(jnp.abs(out_odd - _ref_hsigmoid(x_odd))) < 1e-6

    # 3) Multi-block, even-split pipelined path (small target block -> grid of 8).
    x_mb = jax.random.normal(k3, (4, 32, 64, 64), dtype=jnp.float32) * 4.0
    out_mb = hsigmoid(x_mb, target_block_bytes=256 << 10)
    jax.block_until_ready(out_mb)
    assert out_mb.shape == x_mb.shape and out_mb.dtype == x_mb.dtype
    assert jnp.max(jnp.abs(out_mb - _ref_hsigmoid(x_mb))) < 1e-6

    # 4) Masked partial last block path (rows=45, tile_rows=16 -> grid of 3).
    x_edge = jax.random.normal(k4, (45, 1024), dtype=jnp.float32) * 4.0
    out_edge = hsigmoid(x_edge, target_block_bytes=64 << 10)
    jax.block_until_ready(out_edge)
    assert out_edge.shape == x_edge.shape and out_edge.dtype == x_edge.dtype
    assert jnp.max(jnp.abs(out_edge - _ref_hsigmoid(x_edge))) < 1e-6

    # 5) bf16 input: kernel upcasts to f32 internally (PyTorch opmath behavior).
    x_bf = (jax.random.normal(k5, (2, 4, 16, 16), dtype=jnp.float32) * 4.0).astype(jnp.bfloat16)
    out_bf = hsigmoid(x_bf)
    jax.block_until_ready(out_bf)
    assert out_bf.shape == x_bf.shape and out_bf.dtype == jnp.bfloat16
    assert jnp.max(
        jnp.abs(out_bf.astype(jnp.float32) - _ref_hsigmoid(x_bf).astype(jnp.float32))
    ) < 1e-2

    print("KERNEL_OK")
</pallas_src>

<mosaic_0001>
module attributes {stable_mosaic.version = 11 : i64} {
  func.func @_hsigmoid_kernel(%arg0: i32, %arg1: memref<8x256xf32, #tpu.memory_space<vmem>>, %arg2: memref<8x256xf32, #tpu.memory_space<vmem>>) attributes {dimension_semantics = [#tpu.dimension_semantics<parallel>], iteration_bounds = array<i64: 1>, scalar_prefetch = 0 : i64, scratch_operands = 0 : i64, tpu.core_type = #tpu.core_type<tc>, window_params = [{transform_indices = @transform_0, window_bounds = array<i64: 8, 256>}, {transform_indices = @transform_1, window_bounds = array<i64: 8, 256>}]} {
    %c0 = arith.constant 0 : index
    %c0_0 = arith.constant 0 : index
    %0 = vector.load %arg1[%c0, %c0_0] : memref<8x256xf32, #tpu.memory_space<vmem>>, vector<8x256xf32>
    %cst = arith.constant 3.000000e+00 : f32
    %1 = vector.broadcast %cst : f32 to vector<8x256xf32>
    %2 = arith.addf %0, %1 : vector<8x256xf32>
    %cst_1 = arith.constant 0.000000e+00 : f32
    %3 = vector.broadcast %cst_1 : f32 to vector<8x256xf32>
    %4 = arith.maximumf %2, %3 : vector<8x256xf32>
    %cst_2 = arith.constant 6.000000e+00 : f32
    %5 = vector.broadcast %cst_2 : f32 to vector<8x256xf32>
    %6 = arith.minimumf %4, %5 : vector<8x256xf32>
    %cst_3 = arith.constant 0.166666672 : f32
    %7 = vector.broadcast %cst_3 : f32 to vector<8x256xf32>
    %8 = arith.mulf %6, %7 : vector<8x256xf32>
    %c0_4 = arith.constant 0 : index
    %c0_5 = arith.constant 0 : index
    %9 = vector.load %arg2[%c0_4, %c0_5] : memref<8x256xf32, #tpu.memory_space<vmem>>, vector<8x256xf32>
    tpu.vector_store %arg2[%c0_4, %c0_5], %8 {strides = array<i32>} : memref<8x256xf32, #tpu.memory_space<vmem>>, vector<8x256xf32>,
    return
  }
  func.func @transform_0(%arg0: i32) -> (i32, i32) {
    %c0_i32 = arith.constant 0 : i32
    %c0_i32_0 = arith.constant 0 : i32
    return %arg0, %c0_i32 : i32, i32
  }
  func.func @transform_1(%arg0: i32) -> (i32, i32) {
    %c0_i32 = arith.constant 0 : i32
    %c0_i32_0 = arith.constant 0 : i32
    return %arg0, %c0_i32 : i32, i32
  }
}

</mosaic_0001>

<llo_original>
// kernel: tpu_custom_call.1
$region0: #{tpu_custom_call.1}
  #allocation0 [shape = 'u32[]', space=smem, size = 0x4, offset = 0x4, fixed_abs, tag = 'smem constant byte address 0x4 - core index']
  #allocation1 [shape = 'u32[72,128]{1,0:T(1,128)}', space=vmem, size = 0x9000, scoped, tag = 'internal scratch']
  %s0 = inlined_call_operand.hbm [shape: f32[8,256], index: 0, kind: input, shape index: {}]
  %s1 = inlined_call_operand.hbm [shape: f32[8,256], index: 1, kind: output, shape index: {}]
  %s2 = sld [smem:[#allocation0]]
  $region18: #{tpu_custom_call.1} parent=0
    _
  %s4 = ssub.s32 1, %s2
  %s5 = scalar_select 0, %s4, %s2
  $region1: #{tpu_custom_call.1} parent=0
    #allocation2 [shape = 'u8[8192]{0}', space=vmem, size = 0x2000, scoped, tag = 'input window, operand 0, single buffered']
    #allocation3 [shape = 's32[1]{0}', space=sflag, size = 0x4, scoped, tag = 'scoped memory for tpu_custom_call.1']
    #allocation4 [shape = 's32[1]{0}', space=sflag, size = 0x4, scoped, tag = 'scoped memory for tpu_custom_call.1']
    #allocation5 [shape = 'u8[8192]{0}', space=vmem, size = 0x2000, scoped, tag = 'output window, operand 0, single buffered']
    %6 = vsyncpa [#allocation3], 0
    %7 = vsyncpa [#allocation4], 0
    // Predicated region
    $region2: #{tpu_custom_call.1} parent=1 // pred_check
      _
    $region3: #{tpu_custom_call.1} parent=1 // pred_check_branch
      %9 = sbr.rel (0) target = $region5
    $region4: #{tpu_custom_call.1} parent=1 // pred_region
      %11 = vsyncadd [#allocation3], 0
      %s13 = sshll.u32 %s0, 4
      %s14 = int_to_ptr.hbm [resolvable:$true] %s13
      %s15 = sshll.u32 [#allocation2], 4
      %s16 = int_to_ptr.vmem [resolvable:$true] %s15
      %18 = dma.hbm_to_vmem [thread:$0]  %s14, 256, %s16, [#allocation3]
    $region5: #{tpu_custom_call.1} parent=1 // pred_fallthru
      _
    // Predicated region
    $region6: #{tpu_custom_call.1} parent=1 // pred_check
      _
    $region7: #{tpu_custom_call.1} parent=1 // pred_check_branch
      %20 = sbr.rel (0) target = $region9
    $region8: #{tpu_custom_call.1} parent=1 // pred_region
      %22 = dma.done [#allocation3], 256
    $region9: #{tpu_custom_call.1} parent=1 // pred_fallthru
      _
    %v23 = vld [vmem:[#allocation2] sm:$0xff]
    %v24 = vld [vmem:[#allocation2 + $0x8] sm:$0xff]
    %v25 = vadd.f32 %v23, 3.0
    %v26 = vadd.f32 %v24, 3.0
    %v27 = vmax.f32 %v25, 0.0
    %v28 = vmax.f32 %v26, 0.0
    %v29 = vmin.f32 %v27, 6.0
    %v30 = vmin.f32 %v28, 6.0
    %v31 = vmul.f32 %v29, 0.16666667
    %v32 = vmul.f32 %v30, 0.16666667
    %33 = vst [vmem:[#allocation5] sm:$0xff] %v31
    %34 = vst [vmem:[#allocation5 + $0x8] sm:$0xff] %v32
    // Predicated region
    $region10: #{tpu_custom_call.1} parent=1 // pred_check
      _
    $region11: #{tpu_custom_call.1} parent=1 // pred_check_branch
      %36 = sbr.rel (0) target = $region13
    $region12: #{tpu_custom_call.1} parent=1 // pred_region
      %38 = vsyncadd [#allocation4], 0
      %s40 = sshll.u32 [#allocation5], 4
      %s41 = int_to_ptr.vmem [resolvable:$true] %s40
      %s42 = sshll.u32 %s1, 4
      %s43 = int_to_ptr.hbm [resolvable:$true] %s42
      %45 = dma.vmem_to_hbm [thread:$0]  %s41, 256, %s43, [#allocation4]
    $region13: #{tpu_custom_call.1} parent=1 // pred_fallthru
      _
    // Predicated region
    $region14: #{tpu_custom_call.1} parent=1 // pred_check
      _
    $region15: #{tpu_custom_call.1} parent=1 // pred_check_branch
      %47 = sbr.rel (0) target = $region17
    $region16: #{tpu_custom_call.1} parent=1 // pred_region
      %49 = dma.done [#allocation4], 256
    $region17: #{tpu_custom_call.1} parent=1 // pred_fallthru
      _
    %50 = vsyncpa [#allocation3], 1
    %51 = vsyncpa [#allocation4], 1

</llo_original>
